<compile_context>
chip_gen: v7x
topology: tpu7x:2x2x1
jax: 0.10.0
libtpu: 0.0.40
codegen_flags: <defaults>
</compile_context>

<pallas_src>
import jax
import jax.numpy as jnp
from jax.experimental import pallas as pl
from jax.experimental.pallas import tpu as pltpu


# ----------------------------------------------------------------------------
# Fused forward kernel (one batch tile per grid step)
#   q   = intersect([proj(a0, r0), negate(proj(a1, r1))])   ('d' branch)
#   ans = entity_table[answer_ids]
# ----------------------------------------------------------------------------
def _fused_forward_kernel(
    # per-tile id inputs (VMEM, int32)
    a0_ids_ref, a1_ids_ref, r0_ids_ref, r1_ids_ref,   # each [TB, 1]
    # full answer ids (SMEM, int32) -- indexed with program_id
    ans_ids_ref,                                      # [B]
    # VMEM-resident tables / weights
    ent_ref, rel_ref,                                 # [NE, D] f32, [NR, D] f32
    w_proj_ref, w1_ref, w2_ref,                       # [D, D] bf16
    # outputs
    q_out_ref, ans_out_ref,                           # [TB, D] f32
):
    TB, D = q_out_ref.shape
    NE = ent_ref.shape[0]
    NR = rel_ref.shape[0]

    # ---- one-hot gather of anchor & relation rows on the MXU -----------------
    ent_iota = jax.lax.broadcasted_iota(jnp.int32, (TB, NE), 1)
    rel_iota = jax.lax.broadcasted_iota(jnp.int32, (TB, NR), 1)
    oh_a = jnp.concatenate(
        [(ent_iota == a0_ids_ref[...]).astype(jnp.float32),
         (ent_iota == a1_ids_ref[...]).astype(jnp.float32)], axis=0)   # [2TB, NE]
    oh_r = jnp.concatenate(
        [(rel_iota == r0_ids_ref[...]).astype(jnp.float32),
         (rel_iota == r1_ids_ref[...]).astype(jnp.float32)], axis=0)   # [2TB, NR]

    anchors = jnp.dot(oh_a, ent_ref[...], preferred_element_type=jnp.float32)  # [2TB, D]
    rels = jnp.dot(oh_r, rel_ref[...], preferred_element_type=jnp.float32)     # [2TB, D]

    # ---- relation projection: both anchors in ONE MXU pass (bf16 in, f32 acc)
    proj = jnp.dot(anchors.astype(jnp.bfloat16), w_proj_ref[...],
                   preferred_element_type=jnp.float32) + rels                  # [2TB, D]

    # ---- 'd' branching: negate the LAST child (rows [TB, 2TB)) ---------------
    c0 = proj[:TB, :]
    c1 = 1.0 - proj[TB:, :]
    children = jnp.concatenate([c0, c1], axis=0)                               # [2TB, D]

    # ---- deep-sets attention intersection (K = 2) -----------------------------
    h = jnp.maximum(
        jnp.dot(children.astype(jnp.bfloat16), w1_ref[...],
                preferred_element_type=jnp.float32), 0.0)
    logits = jnp.dot(h.astype(jnp.bfloat16), w2_ref[...],
                     preferred_element_type=jnp.float32)                       # [2TB, D]

    l0, l1 = logits[:TB, :], logits[TB:, :]
    m = jnp.maximum(l0, l1)
    e0 = jnp.exp(l0 - m)
    e1 = jnp.exp(l1 - m)
    inv = pl.reciprocal(e0 + e1, approx=True)                                  # EUP, ~free
    q_out_ref[...] = ((e0 * inv) * c0 + (e1 * inv) * c1).astype(q_out_ref.dtype)

    # ---- answer ground-truth rows: exact dynamic-sublane copy from VMEM table
    base = pl.program_id(0) * TB
    for b in range(TB):                      # TB is small & static -> unrolled
        aid = ans_ids_ref[base + b]
        ans_out_ref[pl.ds(b, 1), :] = ent_ref[pl.ds(aid, 1), :]


# ----------------------------------------------------------------------------
# Wrapper: one pallas_call for the whole forward
# ----------------------------------------------------------------------------
def graph_embedder_forward(params, anchor_ids, rel_ids, answer_ids, *, tile_b=None):
    """Forward pass for a fixed 2-anchor 'd'-branch query tree.

    anchor_ids: [B, 2] int32, rel_ids: [B, 2] int32, answer_ids: [B] int32
    Returns (query_emb [B, D], answer_emb [B, D]).
    """
    ent_table = params["entity_emb"]
    rel_table = params["rel_emb"]
    B = anchor_ids.shape[0]
    NE, D = ent_table.shape
    NR = rel_table.shape[0]

    if tile_b is None:
        tile_b = B if B <= 128 else 128
    assert B % tile_b == 0, "batch must be divisible by the batch tile"
    num_tiles = B // tile_b

    # split ids so the kernel never slices tiny int arrays
    a0 = anchor_ids[:, 0:1].astype(jnp.int32)
    a1 = anchor_ids[:, 1:2].astype(jnp.int32)
    r0 = rel_ids[:, 0:1].astype(jnp.int32)
    r1 = rel_ids[:, 1:2].astype(jnp.int32)
    ans = answer_ids.astype(jnp.int32)

    # weights only feed the MXU -> store them bf16 (halves DMA + VMEM footprint)
    w_proj = params["w_proj"].astype(jnp.bfloat16)
    w1 = params["w1"].astype(jnp.bfloat16)
    w2 = params["w2"].astype(jnp.bfloat16)

    # TODO(synk): for large vocabularies (~>16-24 MiB on v7x VMEM) fall back to
    # an HBM-resident entity table with manual row-gather DMA instead of the
    # VMEM-resident full-array BlockSpec below.
    id_spec = pl.BlockSpec((tile_b, 1), lambda i: (i, 0))
    ent_spec = pl.BlockSpec((NE, D), lambda i: (0, 0))
    rel_spec = pl.BlockSpec((NR, D), lambda i: (0, 0))
    w_spec = pl.BlockSpec((D, D), lambda i: (0, 0))
    out_spec = pl.BlockSpec((tile_b, D), lambda i: (i, 0))

    q_emb, a_emb = pl.pallas_call(
        _fused_forward_kernel,
        grid=(num_tiles,),
        in_specs=[
            id_spec, id_spec, id_spec, id_spec,                       # a0 a1 r0 r1
            pl.BlockSpec(memory_space=pltpu.MemorySpace.SMEM),        # answer ids
            ent_spec, rel_spec,                                       # tables (VMEM-resident)
            w_spec, w_spec, w_spec,                                   # weights (bf16)
        ],
        out_specs=[out_spec, out_spec],
        out_shape=(
            jax.ShapeDtypeStruct((B, D), jnp.float32),
            jax.ShapeDtypeStruct((B, D), jnp.float32),
        ),
        compiler_params=pltpu.CompilerParams(
            dimension_semantics=("parallel",),      # shards batch tiles across v7x TCs
        ),
    )(a0, a1, r0, r1, ans, ent_table, rel_table, w_proj, w1, w2)
    return q_emb, a_emb


# ----------------------------------------------------------------------------
# Parameter init (deterministic) + pure-JAX reference for sanity checking
# ----------------------------------------------------------------------------
def init_params(key, num_entities, num_relations, embedding_dim):
    k1, k2, k3, k4, k5 = jax.random.split(key, 5)
    scale = 1.0 / jnp.sqrt(embedding_dim)
    return {
        "entity_emb": jax.random.normal(k1, (num_entities, embedding_dim), jnp.float32) * scale,
        "rel_emb": jax.random.normal(k2, (num_relations, embedding_dim), jnp.float32) * scale,
        "w_proj": jax.random.normal(k3, (embedding_dim, embedding_dim), jnp.float32) * scale,
        "w1": jax.random.normal(k4, (embedding_dim, embedding_dim), jnp.float32) * scale,
        "w2": jax.random.normal(k5, (embedding_dim, embedding_dim), jnp.float32) * scale,
    }


def _reference_forward(params, anchor_ids, rel_ids, answer_ids):
    ent, rel = params["entity_emb"], params["rel_emb"]
    a0, a1 = ent[anchor_ids[:, 0]], ent[anchor_ids[:, 1]]
    r0, r1 = rel[rel_ids[:, 0]], rel[rel_ids[:, 1]]
    v0 = a0 @ params["w_proj"] + r0
    v1 = a1 @ params["w_proj"] + r1
    children = jnp.stack([v0, 1.0 - v1], axis=0)                 # [2, B, D]
    h = jax.nn.relu(jnp.einsum("kbd,de->kbe", children, params["w1"]))
    logits = jnp.einsum("kbd,de->kbe", h, params["w2"])
    att = jax.nn.softmax(logits, axis=0)
    return jnp.sum(att * children, axis=0), ent[answer_ids]


# TODO(synk): the general igraph/Queue query-tree traversal of the abstract
# forward() is data-dependent host control flow with no Pallas equivalent; a
# representative fixed query structure (2 anchors -> projections -> 'd'-branch
# intersection with negated last child -> answer) is fused instead.


if __name__ == "__main__":
    NUM_ENTITIES = 32
    NUM_RELATIONS = 8
    EMBEDDING_DIM = 128
    BATCH = 8

    key = jax.random.PRNGKey(0)
    pkey, k_a, k_r, k_ans = jax.random.split(key, 4)

    params = init_params(pkey, NUM_ENTITIES, NUM_RELATIONS, EMBEDDING_DIM)
    anchor_ids = jax.random.randint(k_a, (BATCH, 2), 0, NUM_ENTITIES, jnp.int32)
    rel_ids = jax.random.randint(k_r, (BATCH, 2), 0, NUM_RELATIONS, jnp.int32)
    answer_ids = jax.random.randint(k_ans, (BATCH,), 0, NUM_ENTITIES, jnp.int32)

    query_emb, answer_emb = graph_embedder_forward(params, anchor_ids, rel_ids, answer_ids)
    jax.block_until_ready((query_emb, answer_emb))

    # shape / dtype contract
    assert query_emb.shape == (BATCH, EMBEDDING_DIM)
    assert answer_emb.shape == (BATCH, EMBEDDING_DIM)
    assert query_emb.dtype == jnp.float32
    assert bool(jnp.all(jnp.isfinite(query_emb)))

    # numerical sanity vs. pure-JAX f32 reference (loose tol: bf16 MXU inputs
    # + approx reciprocal); answer rows are an exact table copy -> tight tol.
    q_ref, a_ref = _reference_forward(params, anchor_ids, rel_ids, answer_ids)
    assert bool(jnp.allclose(query_emb, q_ref, atol=3e-2, rtol=3e-2))
    assert bool(jnp.allclose(answer_emb, a_ref, atol=1e-6, rtol=1e-6))

    print("KERNEL_OK")
</pallas_src>

<mosaic_0001>
module attributes {stable_mosaic.version = 11 : i64} {
  func.func @_fused_forward_kernel(%arg0: i32, %arg1: memref<8x1xi32, #tpu.memory_space<vmem>>, %arg2: memref<8x1xi32, #tpu.memory_space<vmem>>, %arg3: memref<8x1xi32, #tpu.memory_space<vmem>>, %arg4: memref<8x1xi32, #tpu.memory_space<vmem>>, %arg5: memref<8xi32, #tpu.memory_space<smem>>, %arg6: memref<32x128xf32, #tpu.memory_space<vmem>>, %arg7: memref<8x128xf32, #tpu.memory_space<vmem>>, %arg8: memref<128x128xbf16, #tpu.memory_space<vmem>>, %arg9: memref<128x128xbf16, #tpu.memory_space<vmem>>, %arg10: memref<128x128xbf16, #tpu.memory_space<vmem>>, %arg11: memref<8x128xf32, #tpu.memory_space<vmem>>, %arg12: memref<8x128xf32, #tpu.memory_space<vmem>>) attributes {dimension_semantics = [#tpu.dimension_semantics<parallel>], iteration_bounds = array<i64: 1>, scalar_prefetch = 0 : i64, scratch_operands = 0 : i64, tpu.core_type = #tpu.core_type<tc>, window_params = [{transform_indices = @transform_0, window_bounds = array<i64: 8, 1>}, {transform_indices = @transform_1, window_bounds = array<i64: 8, 1>}, {transform_indices = @transform_2, window_bounds = array<i64: 8, 1>}, {transform_indices = @transform_3, window_bounds = array<i64: 8, 1>}, {transform_indices = @transform_4, window_bounds = array<i64: 8>}, {pipeline_mode = #tpu.pipeline_mode<synchronous>, transform_indices = @transform_5, window_bounds = array<i64: 32, 128>}, {pipeline_mode = #tpu.pipeline_mode<synchronous>, transform_indices = @transform_6, window_bounds = array<i64: 8, 128>}, {pipeline_mode = #tpu.pipeline_mode<synchronous>, transform_indices = @transform_7, window_bounds = array<i64: 128, 128>}, {pipeline_mode = #tpu.pipeline_mode<synchronous>, transform_indices = @transform_8, window_bounds = array<i64: 128, 128>}, {pipeline_mode = #tpu.pipeline_mode<synchronous>, transform_indices = @transform_9, window_bounds = array<i64: 128, 128>}, {transform_indices = @transform_10, window_bounds = array<i64: 8, 128>}, {transform_indices = @transform_11, window_bounds = array<i64: 8, 128>}]} {
    %0 = tpu.iota {dimensions = array<i32: 1>} : vector<8x32xi32>
    %1 = tpu.iota {dimensions = array<i32: 1>} : vector<8x8xi32>
    %c0 = arith.constant 0 : index
    %c0_0 = arith.constant 0 : index
    %2 = vector.load %arg1[%c0, %c0_0] : memref<8x1xi32, #tpu.memory_space<vmem>>, vector<8x1xi32>
    %3 = vector.broadcast %2 : vector<8x1xi32> to vector<8x32xi32>
    %4 = arith.cmpi eq, %0, %3 : vector<8x32xi32>
    %5 = arith.extui %4 : vector<8x32xi1> to vector<8x32xi32>
    %6 = arith.sitofp %5 : vector<8x32xi32> to vector<8x32xf32>
    %c0_1 = arith.constant 0 : index
    %c0_2 = arith.constant 0 : index
    %7 = vector.load %arg2[%c0_1, %c0_2] : memref<8x1xi32, #tpu.memory_space<vmem>>, vector<8x1xi32>
    %8 = vector.broadcast %7 : vector<8x1xi32> to vector<8x32xi32>
    %9 = arith.cmpi eq, %0, %8 : vector<8x32xi32>
    %10 = arith.extui %9 : vector<8x32xi1> to vector<8x32xi32>
    %11 = arith.sitofp %10 : vector<8x32xi32> to vector<8x32xf32>
    %12 = tpu.concatenate %6, %11 in 0 : vector<8x32xf32>, vector<8x32xf32> -> vector<16x32xf32>
    %c0_3 = arith.constant 0 : index
    %c0_4 = arith.constant 0 : index
    %13 = vector.load %arg3[%c0_3, %c0_4] : memref<8x1xi32, #tpu.memory_space<vmem>>, vector<8x1xi32>
    %14 = vector.broadcast %13 : vector<8x1xi32> to vector<8x8xi32>
    %15 = arith.cmpi eq, %1, %14 : vector<8x8xi32>
    %16 = arith.extui %15 : vector<8x8xi1> to vector<8x8xi32>
    %17 = arith.sitofp %16 : vector<8x8xi32> to vector<8x8xf32>
    %c0_5 = arith.constant 0 : index
    %c0_6 = arith.constant 0 : index
    %18 = vector.load %arg4[%c0_5, %c0_6] : memref<8x1xi32, #tpu.memory_space<vmem>>, vector<8x1xi32>
    %19 = vector.broadcast %18 : vector<8x1xi32> to vector<8x8xi32>
    %20 = arith.cmpi eq, %1, %19 : vector<8x8xi32>
    %21 = arith.extui %20 : vector<8x8xi1> to vector<8x8xi32>
    %22 = arith.sitofp %21 : vector<8x8xi32> to vector<8x8xf32>
    %23 = tpu.concatenate %17, %22 in 0 : vector<8x8xf32>, vector<8x8xf32> -> vector<16x8xf32>
    %c0_7 = arith.constant 0 : index
    %c0_8 = arith.constant 0 : index
    %24 = vector.load %arg6[%c0_7, %c0_8] : memref<32x128xf32, #tpu.memory_space<vmem>>, vector<32x128xf32>
    %cst = arith.constant dense<0.000000e+00> : vector<16x128xf32>
    %25 = tpu.matmul %12, %24, %cst {dimension_numbers = #tpu.dot_dimension_numbers<[1], [0], [0], [1], [0, 0, 1, 1], [], []>} : vector<16x32xf32>, vector<32x128xf32>, vector<16x128xf32> -> vector<16x128xf32>
    %c0_9 = arith.constant 0 : index
    %c0_10 = arith.constant 0 : index
    %26 = vector.load %arg7[%c0_9, %c0_10] : memref<8x128xf32, #tpu.memory_space<vmem>>, vector<8x128xf32>
    %cst_11 = arith.constant dense<0.000000e+00> : vector<16x128xf32>
    %27 = tpu.matmul %23, %26, %cst_11 {dimension_numbers = #tpu.dot_dimension_numbers<[1], [0], [0], [1], [0, 0, 1, 1], [], []>} : vector<16x8xf32>, vector<8x128xf32>, vector<16x128xf32> -> vector<16x128xf32>
    %28 = arith.truncf %25 : vector<16x128xf32> to vector<16x128xbf16>
    %c0_12 = arith.constant 0 : index
    %c0_13 = arith.constant 0 : index
    %29 = vector.load %arg8[%c0_12, %c0_13] : memref<128x128xbf16, #tpu.memory_space<vmem>>, vector<128x128xbf16>
    %cst_14 = arith.constant dense<0.000000e+00> : vector<16x128xf32>
    %30 = tpu.matmul %28, %29, %cst_14 {dimension_numbers = #tpu.dot_dimension_numbers<[1], [0], [0], [1], [0, 0, 1, 1], [], []>} : vector<16x128xbf16>, vector<128x128xbf16>, vector<16x128xf32> -> vector<16x128xf32>
    %31 = arith.addf %30, %27 : vector<16x128xf32>
    %32 = vector.extract_strided_slice %31 {offsets = [0, 0], sizes = [8, 128], strides = [1, 1]} : vector<16x128xf32> to vector<8x128xf32>
    %33 = vector.extract_strided_slice %31 {offsets = [8, 0], sizes = [8, 128], strides = [1, 1]} : vector<16x128xf32> to vector<8x128xf32>
    %cst_15 = arith.constant 1.000000e+00 : f32
    %34 = vector.broadcast %cst_15 : f32 to vector<8x128xf32>
    %35 = arith.subf %34, %33 : vector<8x128xf32>
    %36 = tpu.concatenate %32, %35 in 0 : vector<8x128xf32>, vector<8x128xf32> -> vector<16x128xf32>
    %37 = arith.truncf %36 : vector<16x128xf32> to vector<16x128xbf16>
    %c0_16 = arith.constant 0 : index
    %c0_17 = arith.constant 0 : index
    %38 = vector.load %arg9[%c0_16, %c0_17] : memref<128x128xbf16, #tpu.memory_space<vmem>>, vector<128x128xbf16>
    %cst_18 = arith.constant dense<0.000000e+00> : vector<16x128xf32>
    %39 = tpu.matmul %37, %38, %cst_18 {dimension_numbers = #tpu.dot_dimension_numbers<[1], [0], [0], [1], [0, 0, 1, 1], [], []>} : vector<16x128xbf16>, vector<128x128xbf16>, vector<16x128xf32> -> vector<16x128xf32>
    %cst_19 = arith.constant 0.000000e+00 : f32
    %40 = vector.broadcast %cst_19 : f32 to vector<16x128xf32>
    %41 = arith.maximumf %39, %40 : vector<16x128xf32>
    %42 = arith.truncf %41 : vector<16x128xf32> to vector<16x128xbf16>
    %c0_20 = arith.constant 0 : index
    %c0_21 = arith.constant 0 : index
    %43 = vector.load %arg10[%c0_20, %c0_21] : memref<128x128xbf16, #tpu.memory_space<vmem>>, vector<128x128xbf16>
    %cst_22 = arith.constant dense<0.000000e+00> : vector<16x128xf32>
    %44 = tpu.matmul %42, %43, %cst_22 {dimension_numbers = #tpu.dot_dimension_numbers<[1], [0], [0], [1], [0, 0, 1, 1], [], []>} : vector<16x128xbf16>, vector<128x128xbf16>, vector<16x128xf32> -> vector<16x128xf32>
    %45 = vector.extract_strided_slice %44 {offsets = [0, 0], sizes = [8, 128], strides = [1, 1]} : vector<16x128xf32> to vector<8x128xf32>
    %46 = vector.extract_strided_slice %44 {offsets = [8, 0], sizes = [8, 128], strides = [1, 1]} : vector<16x128xf32> to vector<8x128xf32>
    %47 = arith.maximumf %45, %46 : vector<8x128xf32>
    %48 = arith.subf %45, %47 : vector<8x128xf32>
    %49 = math.exp %48 : vector<8x128xf32>
    %50 = arith.subf %46, %47 : vector<8x128xf32>
    %51 = math.exp %50 : vector<8x128xf32>
    %52 = arith.addf %49, %51 : vector<8x128xf32>
    %53 = tpu.reciprocal %52 {approx = true} : vector<8x128xf32> -> vector<8x128xf32>
    %54 = arith.mulf %49, %53 : vector<8x128xf32>
    %55 = arith.mulf %54, %32 : vector<8x128xf32>
    %56 = arith.mulf %51, %53 : vector<8x128xf32>
    %57 = arith.mulf %56, %35 : vector<8x128xf32>
    %58 = arith.addf %55, %57 : vector<8x128xf32>
    %c0_23 = arith.constant 0 : index
    %c0_24 = arith.constant 0 : index
    %59 = vector.load %arg11[%c0_23, %c0_24] : memref<8x128xf32, #tpu.memory_space<vmem>>, vector<8x128xf32>
    tpu.vector_store %arg11[%c0_23, %c0_24], %58 {strides = array<i32>} : memref<8x128xf32, #tpu.memory_space<vmem>>, vector<8x128xf32>,
    %c8_i32 = arith.constant 8 : i32
    %60 = arith.muli %arg0, %c8_i32 : i32
    %c0_i32 = arith.constant 0 : i32
    %61 = arith.addi %60, %c0_i32 : i32
    %62 = arith.index_cast %61 : i32 to index
    %63 = memref.load %arg5[%62] : memref<8xi32, #tpu.memory_space<smem>>
    %64 = arith.index_cast %63 : i32 to index
    %c0_25 = arith.constant 0 : index
    %65 = vector.load %arg6[%64, %c0_25] : memref<32x128xf32, #tpu.memory_space<vmem>>, vector<1x128xf32>
    %c0_26 = arith.constant 0 : index
    %c0_27 = arith.constant 0 : index
    %66 = vector.load %arg12[%c0_26, %c0_27] : memref<8x128xf32, #tpu.memory_space<vmem>>, vector<1x128xf32>
    tpu.vector_store %arg12[%c0_26, %c0_27], %65 {strides = array<i32>} : memref<8x128xf32, #tpu.memory_space<vmem>>, vector<1x128xf32>,
    %c1_i32 = arith.constant 1 : i32
    %67 = arith.addi %60, %c1_i32 : i32
    %68 = arith.index_cast %67 : i32 to index
    %69 = memref.load %arg5[%68] : memref<8xi32, #tpu.memory_space<smem>>
    %70 = arith.index_cast %69 : i32 to index
    %c0_28 = arith.constant 0 : index
    %71 = vector.load %arg6[%70, %c0_28] : memref<32x128xf32, #tpu.memory_space<vmem>>, vector<1x128xf32>
    %c1 = arith.constant 1 : index
    %c0_29 = arith.constant 0 : index
    %72 = vector.load %arg12[%c1, %c0_29] : memref<8x128xf32, #tpu.memory_space<vmem>>, vector<1x128xf32>
    tpu.vector_store %arg12[%c1, %c0_29], %71 {strides = array<i32>} : memref<8x128xf32, #tpu.memory_space<vmem>>, vector<1x128xf32>,
    %c2_i32 = arith.constant 2 : i32
    %73 = arith.addi %60, %c2_i32 : i32
    %74 = arith.index_cast %73 : i32 to index
    %75 = memref.load %arg5[%74] : memref<8xi32, #tpu.memory_space<smem>>
    %76 = arith.index_cast %75 : i32 to index
    %c0_30 = arith.constant 0 : index
    %77 = vector.load %arg6[%76, %c0_30] : memref<32x128xf32, #tpu.memory_space<vmem>>, vector<1x128xf32>
    %c2 = arith.constant 2 : index
    %c0_31 = arith.constant 0 : index
    %78 = vector.load %arg12[%c2, %c0_31] : memref<8x128xf32, #tpu.memory_space<vmem>>, vector<1x128xf32>
    tpu.vector_store %arg12[%c2, %c0_31], %77 {strides = array<i32>} : memref<8x128xf32, #tpu.memory_space<vmem>>, vector<1x128xf32>,
    %c3_i32 = arith.constant 3 : i32
    %79 = arith.addi %60, %c3_i32 : i32
    %80 = arith.index_cast %79 : i32 to index
    %81 = memref.load %arg5[%80] : memref<8xi32, #tpu.memory_space<smem>>
    %82 = arith.index_cast %81 : i32 to index
    %c0_32 = arith.constant 0 : index
    %83 = vector.load %arg6[%82, %c0_32] : memref<32x128xf32, #tpu.memory_space<vmem>>, vector<1x128xf32>
    %c3 = arith.constant 3 : index
    %c0_33 = arith.constant 0 : index
    %84 = vector.load %arg12[%c3, %c0_33] : memref<8x128xf32, #tpu.memory_space<vmem>>, vector<1x128xf32>
    tpu.vector_store %arg12[%c3, %c0_33], %83 {strides = array<i32>} : memref<8x128xf32, #tpu.memory_space<vmem>>, vector<1x128xf32>,
    %c4_i32 = arith.constant 4 : i32
    %85 = arith.addi %60, %c4_i32 : i32
    %86 = arith.index_cast %85 : i32 to index
    %87 = memref.load %arg5[%86] : memref<8xi32, #tpu.memory_space<smem>>
    %88 = arith.index_cast %87 : i32 to index
    %c0_34 = arith.constant 0 : index
    %89 = vector.load %arg6[%88, %c0_34] : memref<32x128xf32, #tpu.memory_space<vmem>>, vector<1x128xf32>
    %c4 = arith.constant 4 : index
    %c0_35 = arith.constant 0 : index
    %90 = vector.load %arg12[%c4, %c0_35] : memref<8x128xf32, #tpu.memory_space<vmem>>, vector<1x128xf32>
    tpu.vector_store %arg12[%c4, %c0_35], %89 {strides = array<i32>} : memref<8x128xf32, #tpu.memory_space<vmem>>, vector<1x128xf32>,
    %c5_i32 = arith.constant 5 : i32
    %91 = arith.addi %60, %c5_i32 : i32
    %92 = arith.index_cast %91 : i32 to index
    %93 = memref.load %arg5[%92] : memref<8xi32, #tpu.memory_space<smem>>
    %94 = arith.index_cast %93 : i32 to index
    %c0_36 = arith.constant 0 : index
    %95 = vector.load %arg6[%94, %c0_36] : memref<32x128xf32, #tpu.memory_space<vmem>>, vector<1x128xf32>
    %c5 = arith.constant 5 : index
    %c0_37 = arith.constant 0 : index
    %96 = vector.load %arg12[%c5, %c0_37] : memref<8x128xf32, #tpu.memory_space<vmem>>, vector<1x128xf32>
    tpu.vector_store %arg12[%c5, %c0_37], %95 {strides = array<i32>} : memref<8x128xf32, #tpu.memory_space<vmem>>, vector<1x128xf32>,
    %c6_i32 = arith.constant 6 : i32
    %97 = arith.addi %60, %c6_i32 : i32
    %98 = arith.index_cast %97 : i32 to index
    %99 = memref.load %arg5[%98] : memref<8xi32, #tpu.memory_space<smem>>
    %100 = arith.index_cast %99 : i32 to index
    %c0_38 = arith.constant 0 : index
    %101 = vector.load %arg6[%100, %c0_38] : memref<32x128xf32, #tpu.memory_space<vmem>>, vector<1x128xf32>
    %c6 = arith.constant 6 : index
    %c0_39 = arith.constant 0 : index
    %102 = vector.load %arg12[%c6, %c0_39] : memref<8x128xf32, #tpu.memory_space<vmem>>, vector<1x128xf32>
    tpu.vector_store %arg12[%c6, %c0_39], %101 {strides = array<i32>} : memref<8x128xf32, #tpu.memory_space<vmem>>, vector<1x128xf32>,
    %c7_i32 = arith.constant 7 : i32
    %103 = arith.addi %60, %c7_i32 : i32
    %104 = arith.index_cast %103 : i32 to index
    %105 = memref.load %arg5[%104] : memref<8xi32, #tpu.memory_space<smem>>
    %106 = arith.index_cast %105 : i32 to index
    %c0_40 = arith.constant 0 : index
    %107 = vector.load %arg6[%106, %c0_40] : memref<32x128xf32, #tpu.memory_space<vmem>>, vector<1x128xf32>
    %c7 = arith.constant 7 : index
    %c0_41 = arith.constant 0 : index
    %108 = vector.load %arg12[%c7, %c0_41] : memref<8x128xf32, #tpu.memory_space<vmem>>, vector<1x128xf32>
    tpu.vector_store %arg12[%c7, %c0_41], %107 {strides = array<i32>} : memref<8x128xf32, #tpu.memory_space<vmem>>, vector<1x128xf32>,
    return
  }
  func.func @transform_0(%arg0: i32) -> (i32, i32) {
    %c0_i32 = arith.constant 0 : i32
    %c0_i32_0 = arith.constant 0 : i32
    return %arg0, %c0_i32 : i32, i32
  }
  func.func @transform_1(%arg0: i32) -> (i32, i32) {
    %c0_i32 = arith.constant 0 : i32
    %c0_i32_0 = arith.constant 0 : i32
    return %arg0, %c0_i32 : i32, i32
  }
  func.func @transform_2(%arg0: i32) -> (i32, i32) {
    %c0_i32 = arith.constant 0 : i32
    %c0_i32_0 = arith.constant 0 : i32
    return %arg0, %c0_i32 : i32, i32
  }
  func.func @transform_3(%arg0: i32) -> (i32, i32) {
    %c0_i32 = arith.constant 0 : i32
    %c0_i32_0 = arith.constant 0 : i32
    return %arg0, %c0_i32 : i32, i32
  }
  func.func @transform_4(%arg0: i32) -> i32 {
    %c0_i32 = arith.constant 0 : i32
    %c0_i32_0 = arith.constant 0 : i32
    return %c0_i32 : i32
  }
  func.func @transform_5(%arg0: i32) -> (i32, i32) {
    %c0_i32 = arith.constant 0 : i32
    %c0_i32_0 = arith.constant 0 : i32
    %c0_i32_1 = arith.constant 0 : i32
    return %c0_i32, %c0_i32_0 : i32, i32
  }
  func.func @transform_6(%arg0: i32) -> (i32, i32) {
    %c0_i32 = arith.constant 0 : i32
    %c0_i32_0 = arith.constant 0 : i32
    %c0_i32_1 = arith.constant 0 : i32
    return %c0_i32, %c0_i32_0 : i32, i32
  }
  func.func @transform_7(%arg0: i32) -> (i32, i32) {
    %c0_i32 = arith.constant 0 : i32
    %c0_i32_0 = arith.constant 0 : i32
    %c0_i32_1 = arith.constant 0 : i32
    return %c0_i32, %c0_i32_0 : i32, i32
  }
  func.func @transform_8(%arg0: i32) -> (i32, i32) {
    %c0_i32 = arith.constant 0 : i32
    %c0_i32_0 = arith.constant 0 : i32
    %c0_i32_1 = arith.constant 0 : i32
    return %c0_i32, %c0_i32_0 : i32, i32
  }
  func.func @transform_9(%arg0: i32) -> (i32, i32) {
    %c0_i32 = arith.constant 0 : i32
    %c0_i32_0 = arith.constant 0 : i32
    %c0_i32_1 = arith.constant 0 : i32
    return %c0_i32, %c0_i32_0 : i32, i32
  }
  func.func @transform_10(%arg0: i32) -> (i32, i32) {
    %c0_i32 = arith.constant 0 : i32
    %c0_i32_0 = arith.constant 0 : i32
    return %arg0, %c0_i32 : i32, i32
  }
  func.func @transform_11(%arg0: i32) -> (i32, i32) {
    %c0_i32 = arith.constant 0 : i32
    %c0_i32_0 = arith.constant 0 : i32
    return %arg0, %c0_i32 : i32, i32
  }
}

</mosaic_0001>

<llo_original>
// kernel: tpu_custom_call.1
$region0: #{tpu_custom_call.1}
  #allocation0 [shape = 'u32[]', space=smem, size = 0x4, offset = 0x4, fixed_abs, tag = 'smem constant byte address 0x4 - core index']
  #allocation1 [shape = 'u32[144,128]{1,0:T(1,128)}', space=vmem, size = 0x12000, scoped, tag = 'internal scratch']
  %s0 = inlined_call_operand.vmem [shape: s32[8,1], index: 0, kind: input, shape index: {}]
  %s1 = inlined_call_operand.vmem [shape: s32[8,1], index: 1, kind: input, shape index: {}]
  %s2 = inlined_call_operand.vmem [shape: s32[8,1], index: 2, kind: input, shape index: {}]
  %s3 = inlined_call_operand.vmem [shape: s32[8,1], index: 3, kind: input, shape index: {}]
  %s4 = inlined_call_operand.vmem [shape: s32[8], index: 4, kind: input, shape index: {}]
  %s5 = inlined_call_operand.hbm [shape: f32[32,128], index: 5, kind: input, shape index: {}]
  %s6 = inlined_call_operand.hbm [shape: f32[8,128], index: 6, kind: input, shape index: {}]
  %s7 = inlined_call_operand.hbm [shape: bf16[128,128], index: 7, kind: input, shape index: {}]
  %s8 = inlined_call_operand.vmem [shape: bf16[128,128], index: 8, kind: input, shape index: {}]
  %s9 = inlined_call_operand.hbm [shape: bf16[128,128], index: 9, kind: input, shape index: {}]
  %s10 = inlined_call_operand.hbm [shape: f32[8,128], index: 10, kind: output, shape index: {0}]
  %s11 = inlined_call_operand.hbm [shape: f32[8,128], index: 11, kind: output, shape index: {1}]
  %12 = xla_tuple %s10, %s11
  %s13 = sld [smem:[#allocation0]]
  $region78: #{tpu_custom_call.1} parent=0
    _
  %s15 = ssub.s32 1, %s13
  %s16 = scalar_select 0, %s15, %s13
  $region1: #{tpu_custom_call.1} parent=0
    #allocation2 [shape = 'u8[512]{0}', space=smem, size = 0x200, scoped, tag = 'input window, operand 4, single buffered']
    #allocation3 [shape = 's32[1]{0}', space=sflag, size = 0x4, scoped, tag = 'scoped memory for tpu_custom_call.1']
    #allocation4 [shape = 's32[1]{0}', space=sflag, size = 0x4, scoped, tag = 'scoped memory for tpu_custom_call.1']
    #allocation5 [shape = 's32[1]{0}', space=sflag, size = 0x4, scoped, tag = 'scoped memory for tpu_custom_call.1']
    #allocation6 [shape = 'u8[16384]{0}', space=vmem, size = 0x4000, scoped, tag = 'input window, operand 5, single buffered']
    #allocation7 [shape = 'u8[4096]{0}', space=vmem, size = 0x1000, scoped, tag = 'input window, operand 6, single buffered']
    #allocation8 [shape = 's32[1]{0}', space=sflag, size = 0x4, scoped, tag = 'scoped memory for tpu_custom_call.1']
    #allocation9 [shape = 'u8[32768]{0}', space=vmem, size = 0x8000, scoped, tag = 'input window, operand 7, single buffered']
    #allocation10 [shape = 'u8[32768]{0}', space=vmem, size = 0x8000, scoped, tag = 'input window, operand 9, single buffered']
    #allocation11 [shape = 's32[1]{0}', space=sflag, size = 0x4, scoped, tag = 'scoped memory for tpu_custom_call.1']
    #allocation12 [shape = 'u8[4096]{0}', space=vmem, size = 0x1000, scoped, tag = 'output window, operand 0, single buffered']
    #allocation13 [shape = 'u8[4096]{0}', space=vmem, size = 0x1000, scoped, tag = 'output window, operand 1, single buffered']
    #allocation14 [shape = 's32[1]{0}', space=sflag, size = 0x4, scoped, tag = 'scoped memory for tpu_custom_call.1']
    %17 = vsyncpa [#allocation5], 0
    %18 = vsyncpa [#allocation3], 0
    %19 = vsyncpa [#allocation8], 0
    %20 = vsyncpa [#allocation11], 0
    %21 = vsyncpa [#allocation4], 0
    %22 = vsyncpa [#allocation14], 0
    // Predicated region
    $region2: #{tpu_custom_call.1} parent=1 // pred_check
      _
    $region3: #{tpu_custom_call.1} parent=1 // pred_check_branch
      %24 = sbr.rel (0) target = $region5
    $region4: #{tpu_custom_call.1} parent=1 // pred_region
      _
    $region5: #{tpu_custom_call.1} parent=1 // pred_fallthru
      _
    // Predicated region
    $region6: #{tpu_custom_call.1} parent=1 // pred_check
      _
    $region7: #{tpu_custom_call.1} parent=1 // pred_check_branch
      %26 = sbr.rel (0) target = $region9
    $region8: #{tpu_custom_call.1} parent=1 // pred_region
      _
    $region9: #{tpu_custom_call.1} parent=1 // pred_fallthru
      _
    // Predicated region
    $region10: #{tpu_custom_call.1} parent=1 // pred_check
      _
    $region11: #{tpu_custom_call.1} parent=1 // pred_check_branch
      %28 = sbr.rel (0) target = $region13
    $region12: #{tpu_custom_call.1} parent=1 // pred_region
      _
    $region13: #{tpu_custom_call.1} parent=1 // pred_fallthru
      _
    // Predicated region
    $region14: #{tpu_custom_call.1} parent=1 // pred_check
      _
    $region15: #{tpu_custom_call.1} parent=1 // pred_check_branch
      %30 = sbr.rel (0) target = $region17
    $region16: #{tpu_custom_call.1} parent=1 // pred_region
      _
    $region17: #{tpu_custom_call.1} parent=1 // pred_fallthru
      _
    // Predicated region
    $region18: #{tpu_custom_call.1} parent=1 // pred_check
      _
    $region19: #{tpu_custom_call.1} parent=1 // pred_check_branch
      %32 = sbr.rel (0) target = $region21
    $region20: #{tpu_custom_call.1} parent=1 // pred_region
      %s34 = ssub.s32 16, 16
      %35 = vsyncadd [#allocation5], %s34
      %s37 = sshll.u32 %s4, 4
      %s38 = int_to_ptr.vmem [resolvable:$true] %s37
      %40 = dma.vmem_to_smem %s38, 16, [#allocation2], [#allocation5]
    $region21: #{tpu_custom_call.1} parent=1 // pred_fallthru
      _
    // Predicated region
    $region22: #{tpu_custom_call.1} parent=1 // pred_check
      _
    $region23: #{tpu_custom_call.1} parent=1 // pred_check_branch
      %42 = sbr.rel (0) target = $region25
    $region24: #{tpu_custom_call.1} parent=1 // pred_region
      %s44 = ssub.s32 512, 512
      %45 = vsyncadd [#allocation3], %s44
      %s46 = sshll.u32 [#allocation6], 4
      %s47 = int_to_ptr.vmem [resolvable:$true] %s46
      %52 = dma.hbm_to_vmem [thread:$0]  %s5, 512, %s47, [#allocation3], 128, 128, 8
    $region25: #{tpu_custom_call.1} parent=1 // pred_fallthru
      _
    // Predicated region
    $region26: #{tpu_custom_call.1} parent=1 // pred_check
      _
    $region27: #{tpu_custom_call.1} parent=1 // pred_check_branch
      %54 = sbr.rel (0) target = $region29
    $region28: #{tpu_custom_call.1} parent=1 // pred_region
      %s56 = ssub.s32 128, 128
      %57 = vsyncadd [#allocation8], %s56
      %s59 = sshll.u32 [#allocation7], 4
      %s60 = int_to_ptr.vmem [resolvable:$true] %s59
      %62 = dma.hbm_to_vmem [thread:$0]  %s6, 128, %s60, [#allocation8]
    $region29: #{tpu_custom_call.1} parent=1 // pred_fallthru
      _
    // Predicated region
    $region30: #{tpu_custom_call.1} parent=1 // pred_check
      _
    $region31: #{tpu_custom_call.1} parent=1 // pred_check_branch
      %64 = sbr.rel (0) target = $region33
    $region32: #{tpu_custom_call.1} parent=1 // pred_region
      %s66 = ssub.s32 1024, 1024
      %67 = vsyncadd [#allocation8], %s66
      %s68 = sshll.u32 [#allocation9], 4
      %s69 = int_to_ptr.vmem [resolvable:$true] %s68
      %74 = dma.hbm_to_vmem [thread:$0]  %s7, 1024, %s69, [#allocation8], 64, 64, 4
    $region33: #{tpu_custom_call.1} parent=1 // pred_fallthru
      _
    // Predicated region
    $region34: #{tpu_custom_call.1} parent=1 // pred_check
      _
    $region35: #{tpu_custom_call.1} parent=1 // pred_check_branch
      %76 = sbr.rel (0) target = $region37
    $region36: #{tpu_custom_call.1} parent=1 // pred_region
      _
    $region37: #{tpu_custom_call.1} parent=1 // pred_fallthru
      _
    // Predicated region
    $region38: #{tpu_custom_call.1} parent=1 // pred_check
      _
    $region39: #{tpu_custom_call.1} parent=1 // pred_check_branch
      %78 = sbr.rel (0) target = $region41
    $region40: #{tpu_custom_call.1} parent=1 // pred_region
      %s80 = ssub.s32 1024, 1024
      %81 = vsyncadd [#allocation11], %s80
      %s82 = sshll.u32 [#allocation10], 4
      %s83 = int_to_ptr.vmem [resolvable:$true] %s82
      %88 = dma.hbm_to_vmem [thread:$0]  %s9, 1024, %s83, [#allocation11], 64, 64, 4
    $region41: #{tpu_custom_call.1} parent=1 // pred_fallthru
      _
    // Predicated region
    $region42: #{tpu_custom_call.1} parent=1 // pred_check
      _
    $region43: #{tpu_custom_call.1} parent=1 // pred_check_branch
      %90 = sbr.rel (0) target = $region45
    $region44: #{tpu_custom_call.1} parent=1 // pred_region
      %91 = dma.done [#allocation5], 16
    $region45: #{tpu_custom_call.1} parent=1 // pred_fallthru
      _
    // Predicated region
    $region46: #{tpu_custom_call.1} parent=1 // pred_check
      _
    $region47: #{tpu_custom_call.1} parent=1 // pred_check_branch
      %93 = sbr.rel (0) target = $region49
    $region48: #{tpu_custom_call.1} parent=1 // pred_region
      %94 = dma.done [#allocation3], 512
    $region49: #{tpu_custom_call.1} parent=1 // pred_fallthru
      _
    // Predicated region
    $region50: #{tpu_custom_call.1} parent=1 // pred_check
      _
    $region51: #{tpu_custom_call.1} parent=1 // pred_check_branch
      %96 = sbr.rel (0) target = $region53
    $region52: #{tpu_custom_call.1} parent=1 // pred_region
      %97 = dma.done [#allocation8], 128
    $region53: #{tpu_custom_call.1} parent=1 // pred_fallthru
      _
    // Predicated region
    $region54: #{tpu_custom_call.1} parent=1 // pred_check
      _
    $region55: #{tpu_custom_call.1} parent=1 // pred_check_branch
      %99 = sbr.rel (0) target = $region57
    $region56: #{tpu_custom_call.1} parent=1 // pred_region
      %100 = dma.done [#allocation8], 1024
    $region57: #{tpu_custom_call.1} parent=1 // pred_fallthru
      _
    // Predicated region
    $region58: #{tpu_custom_call.1} parent=1 // pred_check
      _
    $region59: #{tpu_custom_call.1} parent=1 // pred_check_branch
      %102 = sbr.rel (0) target = $region61
    $region60: #{tpu_custom_call.1} parent=1 // pred_region
      %103 = dma.done [#allocation11], 1024
    $region61: #{tpu_custom_call.1} parent=1 // pred_fallthru
      _
    %104 = sfence
    %v106 = vlaneseq
    %v107 = vand.u32 %v106, 127
    %v108 = vld [vmem:[%s0] sm:$0xff]
    %109 = vset.pattern.permute.xlu0 0
    %110 = vperm.xlu0 %109, %v108
    %v111 = vpop.permute.xlu0 %110
    %vm112 = vcmp.eq.s32.totalorder %v107, %v111
    %v113 = vsel %vm112, 1, 0
    %v114 = vcvt.s32.f32 %v113
    %v115 = vld [vmem:[%s1] sm:$0xff]
    %116 = vset.pattern.permute.xlu0 0
    %117 = vperm.xlu0 %116, %v115
    %v118 = vpop.permute.xlu0 %117
    %vm119 = vcmp.eq.s32.totalorder %v107, %v118
    %v120 = vsel %vm119, 1, 0
    %v121 = vcvt.s32.f32 %v120
    %v122 = vld [vmem:[%s2] sm:$0xff]
    %123 = vset.pattern.permute.xlu0 0
    %124 = vperm.xlu0 %123, %v122
    %v125 = vpop.permute.xlu0 %124
    %vm126 = vcmp.eq.s32.totalorder %v107, %v125
    %v127 = vsel %vm126, 1, 0
    %v128 = vcvt.s32.f32 %v127
    %v129 = vld [vmem:[%s3] sm:$0xff]
    %130 = vset.pattern.permute.xlu0 0
    %131 = vperm.xlu0 %130, %v129
    %v132 = vpop.permute.xlu0 %131
    %vm133 = vcmp.eq.s32.totalorder %v107, %v132
    %v134 = vsel %vm133, 1, 0
    %v135 = vcvt.s32.f32 %v134
    %v136 = vld [vmem:[#allocation6] sm:$0xff]
    %v137 = vld [vmem:[#allocation6 + $0x8] sm:$0xff]
    %v138 = vld [vmem:[#allocation6 + $0x10] sm:$0xff]
    %v139 = vld [vmem:[#allocation6 + $0x18] sm:$0xff]
    %vm140 = vcmask 261120
    %v142 = vsel %vm140, %v114, 0
    %v145 = vsel %vm140, %v121, 0
    %147 = vmatprep.subr.mxu0 0.0
    %148 = vmatpush1.msra.mxu0 %v136
    %149 = vmatprep.subr.mxu0 0.0
    %150 = vmatpush1.msra.mxu0 %v137
    %151 = vmatprep.subr.mxu0 0.0
    %152 = vmatpush1.msra.mxu0 %v138
    %153 = vmatprep.subr.mxu0 0.0
    %154 = vmatpush1.msra.mxu0 %v139
    %155 = vmatprep.subr.mxu0 0.0
    %156 = vmatpush1.msra.mxu0 0.0
    %157 = vmatprep.subr.mxu0 0.0
    %158 = vmatpush1.msra.mxu0 0.0
    %159 = vmatprep.subr.mxu0 0.0
    %160 = vmatpush1.msra.mxu0 0.0
    %161 = vmatprep.subr.mxu0 0.0
    %162 = vmatpush1.msra.mxu0 0.0
    %163 = vmatprep.subr.mxu0 0.0
    %164 = vmatpush1.msra.mxu0 0.0
    %165 = vmatprep.subr.mxu0 0.0
    %166 = vmatpush1.msra.mxu0 0.0
    %167 = vmatprep.subr.mxu0 0.0
    %168 = vmatpush1.msra.mxu0 0.0
    %169 = vmatprep.subr.mxu0 0.0
    %170 = vmatpush1.msra.mxu0 0.0
    %171 = vmatprep.subr.mxu0 0.0
    %172 = vmatpush1.msra.mxu0 0.0
    %173 = vmatprep.subr.mxu0 0.0
    %174 = vmatpush1.msra.mxu0 0.0
    %175 = vmatprep.subr.mxu0 0.0
    %176 = vmatpush1.msra.mxu0 0.0
    %177 = vmatprep.subr.mxu0 0.0
    %178 = vmatpush1.msra.mxu0 0.0
    %179 = vmatprep.subr.mxu0 0.0
    %180 = vmatpush1.msra.mxu0 0.0
    %181 = vmatprep.subr.mxu0 0.0
    %182 = vmatpush1.msra.mxu0 0.0
    %183 = vmatprep.subr.mxu0 0.0
    %184 = vmatpush1.msra.mxu0 0.0
    %185 = vmatprep.subr.mxu0 0.0
    %186 = vmatpush1.msra.mxu0 0.0
    %187 = vmatprep.subr.mxu0 0.0
    %188 = vmatpush1.msra.mxu0 0.0
    %189 = vmatprep.subr.mxu0 0.0
    %190 = vmatpush1.msra.mxu0 0.0
    %191 = vmatprep.subr.mxu0 0.0
    %192 = vmatpush1.msra.mxu0 0.0
    %193 = vmatprep.subr.mxu0 0.0
    %194 = vmatpush1.msra.mxu0 0.0
    %195 = vmatprep.subr.mxu0 0.0
    %196 = vmatpush1.msra.mxu0 0.0
    %197 = vmatprep.subr.mxu0 0.0
    %198 = vmatpush1.msra.mxu0 0.0
    %199 = vmatprep.subr.mxu0 0.0
    %200 = vmatpush1.msra.mxu0 0.0
    %201 = vmatprep.subr.mxu0 0.0
    %202 = vmatpush1.msra.mxu0 0.0
    %203 = vmatprep.subr.mxu0 0.0
    %204 = vmatpush1.msra.mxu0 0.0
    %205 = vmatprep.subr.mxu0 0.0
    %206 = vmatpush1.msra.mxu0 0.0
    %207 = vmatprep.subr.mxu0 0.0
    %208 = vmatpush1.msra.mxu0 0.0
    %209 = vmatprep.subr.mxu0 0.0
    %210 = vmatpush1.msra.mxu0 0.0
    %211 = vmatprep.mubr.f32.mxu0 0.0
    %212 = vmatmul.mubr.f32.gmra.mrb[0].mxu0 %v142
    %v213 = vpop.f32.mrb[0].mxu0
    %v214 = vadd.f32 0.0, %v213
    %v215 = vpop.f32.mrb[0].mxu0
    %216 = vmatprep.mubr.f32.mxu0 0.0
    %217 = vmatmul.mubr.f32.gmra.mrb[0].mxu0 %v145
    %v218 = vpop.f32.mrb[0].mxu0
    %v219 = vadd.f32 0.0, %v218
    %v220 = vpop.f32.mrb[0].mxu0
    %221 = vdwg.mxu0
    %v222 = vld [vmem:[#allocation7] sm:$0xff]
    %vm223 = vcmask 64512
    %v225 = vsel %vm223, %v128, 0
    %v228 = vsel %vm223, %v135, 0
    %230 = vmatprep.subr.mxu0 0.0
    %231 = vmatpush1.msra.mxu0 %v222
    %232 = vmatprep.subr.mxu0 0.0
    %233 = vmatpush1.msra.mxu0 0.0
    %234 = vmatprep.subr.mxu0 0.0
    %235 = vmatpush1.msra.mxu0 0.0
    %236 = vmatprep.subr.mxu0 0.0
    %237 = vmatpush1.msra.mxu0 0.0
    %238 = vmatprep.subr.mxu0 0.0
    %239 = vmatpush1.msra.mxu0 0.0
    %240 = vmatprep.subr.mxu0 0.0
    %241 = vmatpush1.msra.mxu0 0.0
    %242 = vmatprep.subr.mxu0 0.0
    %243 = vmatpush1.msra.mxu0 0.0
    %244 = vmatprep.subr.mxu0 0.0
    %245 = vmatpush1.msra.mxu0 0.0
    %246 = vmatprep.subr.mxu0 0.0
    %247 = vmatpush1.msra.mxu0 0.0
    %248 = vmatprep.subr.mxu0 0.0
    %249 = vmatpush1.msra.mxu0 0.0
    %250 = vmatprep.subr.mxu0 0.0
    %251 = vmatpush1.msra.mxu0 0.0
    %252 = vmatprep.subr.mxu0 0.0
    %253 = vmatpush1.msra.mxu0 0.0
    %254 = vmatprep.subr.mxu0 0.0
    %255 = vmatpush1.msra.mxu0 0.0
    %256 = vmatprep.subr.mxu0 0.0
    %257 = vmatpush1.msra.mxu0 0.0
    %258 = vmatprep.subr.mxu0 0.0
    %259 = vmatpush1.msra.mxu0 0.0
    %260 = vmatprep.subr.mxu0 0.0
    %261 = vmatpush1.msra.mxu0 0.0
    %262 = vmatprep.subr.mxu0 0.0
    %263 = vmatpush1.msra.mxu0 0.0
    %264 = vmatprep.subr.mxu0 0.0
    %265 = vmatpush1.msra.mxu0 0.0
    %266 = vmatprep.subr.mxu0 0.0
    %267 = vmatpush1.msra.mxu0 0.0
    %268 = vmatprep.subr.mxu0 0.0
    %269 = vmatpush1.msra.mxu0 0.0
    %270 = vmatprep.subr.mxu0 0.0
    %271 = vmatpush1.msra.mxu0 0.0
    %272 = vmatprep.subr.mxu0 0.0
    %273 = vmatpush1.msra.mxu0 0.0
    %274 = vmatprep.subr.mxu0 0.0
    %275 = vmatpush1.msra.mxu0 0.0
    %276 = vmatprep.subr.mxu0 0.0
    %277 = vmatpush1.msra.mxu0 0.0
    %278 = vmatprep.subr.mxu0 0.0
    %279 = vmatpush1.msra.mxu0 0.0
    %280 = vmatprep.subr.mxu0 0.0
    %281 = vmatpush1.msra.mxu0 0.0
    %282 = vmatprep.subr.mxu0 0.0
    %283 = vmatpush1.msra.mxu0 0.0
    %284 = vmatprep.subr.mxu0 0.0
    %285 = vmatpush1.msra.mxu0 0.0
    %286 = vmatprep.subr.mxu0 0.0
    %287 = vmatpush1.msra.mxu0 0.0
    %288 = vmatprep.subr.mxu0 0.0
    %289 = vmatpush1.msra.mxu0 0.0
    %290 = vmatprep.subr.mxu0 0.0
    %291 = vmatpush1.msra.mxu0 0.0
    %292 = vmatprep.subr.mxu0 0.0
    %293 = vmatpush1.msra.mxu0 0.0
    %294 = vmatprep.mubr.f32.mxu0 0.0
    %295 = vmatmul.mubr.f32.gmra.mrb[0].mxu0 %v225
    %v296 = vpop.f32.mrb[0].mxu0
    %v297 = vadd.f32 0.0, %v296
    %v298 = vpop.f32.mrb[0].mxu0
    %299 = vmatprep.mubr.f32.mxu0 0.0
    %300 = vmatmul.mubr.f32.gmra.mrb[0].mxu0 %v228
    %v301 = vpop.f32.mrb[0].mxu0
    %v302 = vadd.f32 0.0, %v301
    %v303 = vpop.f32.mrb[0].mxu0
    %304 = vdwg.mxu0
    %v305 = vpack.c.bf16 %v219, %v214
    %v306 = vld [vmem:[#allocation9] sm:$0xf]
    %v307 = vld [vmem:[#allocation9 + $0x4] sm:$0xf]
    %v308 = vld [vmem:[#allocation9 + $0x8] sm:$0xf]
    %v309 = vld [vmem:[#allocation9 + $0xc] sm:$0xf]
    %v310 = vld [vmem:[#allocation9 + $0x10] sm:$0xf]
    %v311 = vld [vmem:[#allocation9 + $0x14] sm:$0xf]
    %v312 = vld [vmem:[#allocation9 + $0x18] sm:$0xf]
    %v313 = vld [vmem:[#allocation9 + $0x1c] sm:$0xf]
    %v314 = vld [vmem:[#allocation9 + $0x20] sm:$0xf]
    %v315 = vld [vmem:[#allocation9 + $0x24] sm:$0xf]
    %v316 = vld [vmem:[#allocation9 + $0x28] sm:$0xf]
    %v317 = vld [vmem:[#allocation9 + $0x2c] sm:$0xf]
    %v318 = vld [vmem:[#allocation9 + $0x30] sm:$0xf]
    %v319 = vld [vmem:[#allocation9 + $0x34] sm:$0xf]
    %v320 = vld [vmem:[#allocation9 + $0x38] sm:$0xf]
    %v321 = vld [vmem:[#allocation9 + $0x3c] sm:$0xf]
    %v338 = vunpack.c.l.b16 %v306
    %v339 = vunpack.c.l.b16 %v307
    %v340 = vunpack.c.l.b16 %v308
    %v341 = vunpack.c.l.b16 %v309
    %v342 = vunpack.c.l.b16 %v310
    %v343 = vunpack.c.l.b16 %v311
    %v344 = vunpack.c.l.b16 %v312
    %v345 = vunpack.c.l.b16 %v313
    %v346 = vunpack.c.l.b16 %v314
    %v347 = vunpack.c.l.b16 %v315
    %v348 = vunpack.c.l.b16 %v316
    %v349 = vunpack.c.l.b16 %v317
    %v350 = vunpack.c.l.b16 %v318
    %v351 = vunpack.c.l.b16 %v319
    %v352 = vunpack.c.l.b16 %v320
    %v353 = vunpack.c.l.b16 %v321
    %v354 = vpack.c.b16 %v339, %v338
    %v355 = vpack.c.b16 %v341, %v340
    %v356 = vpack.c.b16 %v343, %v342
    %v357 = vpack.c.b16 %v345, %v344
    %v358 = vpack.c.b16 %v347, %v346
    %v359 = vpack.c.b16 %v349, %v348
    %v360 = vpack.c.b16 %v351, %v350
    %v361 = vpack.c.b16 %v353, %v352
    %370 = vmatprep.subr.bf16.mxu0 0
    %371 = vmatpush1.bf16.msra.mxu0 %v354
    %372 = vmatprep.subr.bf16.mxu0 0
    %373 = vmatpush1.bf16.msra.mxu0 %v355
    %374 = vmatprep.subr.bf16.mxu0 0
    %375 = vmatpush1.bf16.msra.mxu0 %v356
    %376 = vmatprep.subr.bf16.mxu0 0
    %377 = vmatpush1.bf16.msra.mxu0 %v357
    %378 = vmatprep.subr.bf16.mxu0 0
    %379 = vmatpush1.bf16.msra.mxu0 %v358
    %380 = vmatprep.subr.bf16.mxu0 0
    %381 = vmatpush1.bf16.msra.mxu0 %v359
    %382 = vmatprep.subr.bf16.mxu0 0
    %383 = vmatpush1.bf16.msra.mxu0 %v360
    %384 = vmatprep.subr.bf16.mxu0 0
    %385 = vmatpush1.bf16.msra.mxu0 %v361
    %386 = vmatprep.subr.bf16.mxu0 0
    %387 = vmatpush1.bf16.msra.mxu0 0
    %388 = vmatprep.subr.bf16.mxu0 0
    %389 = vmatpush1.bf16.msra.mxu0 0
    %390 = vmatprep.subr.bf16.mxu0 0
    %391 = vmatpush1.bf16.msra.mxu0 0
    %392 = vmatprep.subr.bf16.mxu0 0
    %393 = vmatpush1.bf16.msra.mxu0 0
    %394 = vmatprep.subr.bf16.mxu0 0
    %395 = vmatpush1.bf16.msra.mxu0 0
    %396 = vmatprep.subr.bf16.mxu0 0
    %397 = vmatpush1.bf16.msra.mxu0 0
    %398 = vmatprep.subr.bf16.mxu0 0
    %399 = vmatpush1.bf16.msra.mxu0 0
    %400 = vmatprep.subr.bf16.mxu0 0
    %401 = vmatpush1.bf16.msra.mxu0 0
    %402 = vmatprep.mubr.bf16.mxu0 0
    %403 = vmatmul.mubr.bf16.gmra.mrb[0].mxu0 %v305
    %v404 = vpop.f32.mrb[0].mxu0
    %v405 = vadd.f32 %v297, %v404
    %v406 = vpop.f32.mrb[0].mxu0
    %v407 = vpop.f32.mrb[0].mxu0
    %v408 = vadd.f32 %v302, %v407
    %v409 = vpop.f32.mrb[0].mxu0
    %410 = vdwg.mxu0
    %v411 = vsub.f32 1.0, %v408
    %v412 = vpack.c.bf16 %v411, %v405
    %v413 = vld [vmem:[%s8] sm:$0xf]
    %v414 = vld [vmem:[%s8 + $0x4] sm:$0xf]
    %v415 = vld [vmem:[%s8 + $0x8] sm:$0xf]
    %v416 = vld [vmem:[%s8 + $0xc] sm:$0xf]
    %v417 = vld [vmem:[%s8 + $0x10] sm:$0xf]
    %v418 = vld [vmem:[%s8 + $0x14] sm:$0xf]
    %v419 = vld [vmem:[%s8 + $0x18] sm:$0xf]
    %v420 = vld [vmem:[%s8 + $0x1c] sm:$0xf]
    %v421 = vld [vmem:[%s8 + $0x20] sm:$0xf]
    %v422 = vld [vmem:[%s8 + $0x24] sm:$0xf]
    %v423 = vld [vmem:[%s8 + $0x28] sm:$0xf]
    %v424 = vld [vmem:[%s8 + $0x2c] sm:$0xf]
    %v425 = vld [vmem:[%s8 + $0x30] sm:$0xf]
    %v426 = vld [vmem:[%s8 + $0x34] sm:$0xf]
    %v427 = vld [vmem:[%s8 + $0x38] sm:$0xf]
    %v428 = vld [vmem:[%s8 + $0x3c] sm:$0xf]
    %v445 = vunpack.c.l.b16 %v413
    %v446 = vunpack.c.l.b16 %v414
    %v447 = vunpack.c.l.b16 %v415
    %v448 = vunpack.c.l.b16 %v416
    %v449 = vunpack.c.l.b16 %v417
    %v450 = vunpack.c.l.b16 %v418
    %v451 = vunpack.c.l.b16 %v419
    %v452 = vunpack.c.l.b16 %v420
    %v453 = vunpack.c.l.b16 %v421
    %v454 = vunpack.c.l.b16 %v422
    %v455 = vunpack.c.l.b16 %v423
    %v456 = vunpack.c.l.b16 %v424
    %v457 = vunpack.c.l.b16 %v425
    %v458 = vunpack.c.l.b16 %v426
    %v459 = vunpack.c.l.b16 %v427
    %v460 = vunpack.c.l.b16 %v428
    %v461 = vpack.c.b16 %v446, %v445
    %v462 = vpack.c.b16 %v448, %v447
    %v463 = vpack.c.b16 %v450, %v449
    %v464 = vpack.c.b16 %v452, %v451
    %v465 = vpack.c.b16 %v454, %v453
    %v466 = vpack.c.b16 %v456, %v455
    %v467 = vpack.c.b16 %v458, %v457
    %v468 = vpack.c.b16 %v460, %v459
    %477 = vmatprep.subr.bf16.mxu0 0
    %478 = vmatpush1.bf16.msra.mxu0 %v461
    %479 = vmatprep.subr.bf16.mxu0 0
    %480 = vmatpush1.bf16.msra.mxu0 %v462
    %481 = vmatprep.subr.bf16.mxu0 0
    %482 = vmatpush1.bf16.msra.mxu0 %v463
    %483 = vmatprep.subr.bf16.mxu0 0
    %484 = vmatpush1.bf16.msra.mxu0 %v464
    %485 = vmatprep.subr.bf16.mxu0 0
    %486 = vmatpush1.bf16.msra.mxu0 %v465
    %487 = vmatprep.subr.bf16.mxu0 0
    %488 = vmatpush1.bf16.msra.mxu0 %v466
    %489 = vmatprep.subr.bf16.mxu0 0
    %490 = vmatpush1.bf16.msra.mxu0 %v467
    %491 = vmatprep.subr.bf16.mxu0 0
    %492 = vmatpush1.bf16.msra.mxu0 %v468
    %493 = vmatprep.subr.bf16.mxu0 0
    %494 = vmatpush1.bf16.msra.mxu0 0
    %495 = vmatprep.subr.bf16.mxu0 0
    %496 = vmatpush1.bf16.msra.mxu0 0
    %497 = vmatprep.subr.bf16.mxu0 0
    %498 = vmatpush1.bf16.msra.mxu0 0
    %499 = vmatprep.subr.bf16.mxu0 0
    %500 = vmatpush1.bf16.msra.mxu0 0
    %501 = vmatprep.subr.bf16.mxu0 0
    %502 = vmatpush1.bf16.msra.mxu0 0
    %503 = vmatprep.subr.bf16.mxu0 0
    %504 = vmatpush1.bf16.msra.mxu0 0
    %505 = vmatprep.subr.bf16.mxu0 0
    %506 = vmatpush1.bf16.msra.mxu0 0
    %507 = vmatprep.subr.bf16.mxu0 0
    %508 = vmatpush1.bf16.msra.mxu0 0
    %509 = vmatprep.mubr.bf16.mxu0 0
    %510 = vmatmul.mubr.bf16.gmra.mrb[0].mxu0 %v412
    %v511 = vpop.f32.mrb[0].mxu0
    %v512 = vadd.f32 0.0, %v511
    %v513 = vpop.f32.mrb[0].mxu0
    %v514 = vpop.f32.mrb[0].mxu0
    %v515 = vadd.f32 0.0, %v514
    %v516 = vpop.f32.mrb[0].mxu0
    %517 = vdwg.mxu0
    %v518 = vmax.f32 %v512, 0.0
    %v519 = vmax.f32 %v515, 0.0
    %v520 = vpack.c.bf16 %v519, %v518
    %v521 = vld [vmem:[#allocation10] sm:$0xf]
    %v522 = vld [vmem:[#allocation10 + $0x4] sm:$0xf]
    %v523 = vld [vmem:[#allocation10 + $0x8] sm:$0xf]
    %v524 = vld [vmem:[#allocation10 + $0xc] sm:$0xf]
    %v525 = vld [vmem:[#allocation10 + $0x10] sm:$0xf]
    %v526 = vld [vmem:[#allocation10 + $0x14] sm:$0xf]
    %v527 = vld [vmem:[#allocation10 + $0x18] sm:$0xf]
    %v528 = vld [vmem:[#allocation10 + $0x1c] sm:$0xf]
    %v529 = vld [vmem:[#allocation10 + $0x20] sm:$0xf]
    %v530 = vld [vmem:[#allocation10 + $0x24] sm:$0xf]
    %v531 = vld [vmem:[#allocation10 + $0x28] sm:$0xf]
    %v532 = vld [vmem:[#allocation10 + $0x2c] sm:$0xf]
    %v533 = vld [vmem:[#allocation10 + $0x30] sm:$0xf]
    %v534 = vld [vmem:[#allocation10 + $0x34] sm:$0xf]
    %v535 = vld [vmem:[#allocation10 + $0x38] sm:$0xf]
    %v536 = vld [vmem:[#allocation10 + $0x3c] sm:$0xf]
    %v553 = vunpack.c.l.b16 %v521
    %v554 = vunpack.c.l.b16 %v522
    %v555 = vunpack.c.l.b16 %v523
    %v556 = vunpack.c.l.b16 %v524
    %v557 = vunpack.c.l.b16 %v525
    %v558 = vunpack.c.l.b16 %v526
    %v559 = vunpack.c.l.b16 %v527
    %v560 = vunpack.c.l.b16 %v528
    %v561 = vunpack.c.l.b16 %v529
    %v562 = vunpack.c.l.b16 %v530
    %v563 = vunpack.c.l.b16 %v531
    %v564 = vunpack.c.l.b16 %v532
    %v565 = vunpack.c.l.b16 %v533
    %v566 = vunpack.c.l.b16 %v534
    %v567 = vunpack.c.l.b16 %v535
    %v568 = vunpack.c.l.b16 %v536
    %v569 = vpack.c.b16 %v554, %v553
    %v570 = vpack.c.b16 %v556, %v555
    %v571 = vpack.c.b16 %v558, %v557
    %v572 = vpack.c.b16 %v560, %v559
    %v573 = vpack.c.b16 %v562, %v561
    %v574 = vpack.c.b16 %v564, %v563
    %v575 = vpack.c.b16 %v566, %v565
    %v576 = vpack.c.b16 %v568, %v567
    %585 = vmatprep.subr.bf16.mxu0 0
    %586 = vmatpush1.bf16.msra.mxu0 %v569
    %587 = vmatprep.subr.bf16.mxu0 0
    %588 = vmatpush1.bf16.msra.mxu0 %v570
    %589 = vmatprep.subr.bf16.mxu0 0
    %590 = vmatpush1.bf16.msra.mxu0 %v571
    %591 = vmatprep.subr.bf16.mxu0 0
    %592 = vmatpush1.bf16.msra.mxu0 %v572
    %593 = vmatprep.subr.bf16.mxu0 0
    %594 = vmatpush1.bf16.msra.mxu0 %v573
    %595 = vmatprep.subr.bf16.mxu0 0
    %596 = vmatpush1.bf16.msra.mxu0 %v574
    %597 = vmatprep.subr.bf16.mxu0 0
    %598 = vmatpush1.bf16.msra.mxu0 %v575
    %599 = vmatprep.subr.bf16.mxu0 0
    %600 = vmatpush1.bf16.msra.mxu0 %v576
    %601 = vmatprep.subr.bf16.mxu0 0
    %602 = vmatpush1.bf16.msra.mxu0 0
    %603 = vmatprep.subr.bf16.mxu0 0
    %604 = vmatpush1.bf16.msra.mxu0 0
    %605 = vmatprep.subr.bf16.mxu0 0
    %606 = vmatpush1.bf16.msra.mxu0 0
    %607 = vmatprep.subr.bf16.mxu0 0
    %608 = vmatpush1.bf16.msra.mxu0 0
    %609 = vmatprep.subr.bf16.mxu0 0
    %610 = vmatpush1.bf16.msra.mxu0 0
    %611 = vmatprep.subr.bf16.mxu0 0
    %612 = vmatpush1.bf16.msra.mxu0 0
    %613 = vmatprep.subr.bf16.mxu0 0
    %614 = vmatpush1.bf16.msra.mxu0 0
    %615 = vmatprep.subr.bf16.mxu0 0
    %616 = vmatpush1.bf16.msra.mxu0 0
    %617 = vmatprep.mubr.bf16.mxu0 0
    %618 = vmatmul.mubr.bf16.gmra.mrb[0].mxu0 %v520
    %v619 = vpop.f32.mrb[0].mxu0
    %v620 = vadd.f32 0.0, %v619
    %v621 = vpop.f32.mrb[0].mxu0
    %v622 = vpop.f32.mrb[0].mxu0
    %v623 = vadd.f32 0.0, %v622
    %v624 = vpop.f32.mrb[0].mxu0
    %625 = vdwg.mxu0
    %v626 = vmax.f32 %v620, %v623
    %v627 = vsub.f32 %v620, %v626
    %v628 = vmul.f32 %v627, 1.442695
    %v629 = vpow.pop %v628
    %v630 = vsub.f32 %v623, %v626
    %v631 = vmul.f32 %v630, 1.442695
    %v632 = vpow.pop %v631
    %v633 = vadd.f32 %v629, %v632
    %v634 = vrcp.pop %v633
    %v635 = vmul.f32 %v629, %v634
    %v636 = vmul.f32 %v635, %v405
    %v637 = vmul.f32 %v632, %v634
    %v638 = vmul.f32 %v637, %v411
    %v639 = vadd.f32 %v636, %v638
    %640 = vst [vmem:[#allocation12] sm:$0xff] %v639
    %s641 = smul.u32 0, 8
    %s642 = sld [smem:[#allocation2 + %s641]]
    %s643 = scalar_lea.vmem [#allocation6], %s642
    %v644 = vld [vmem:[%s643] sm:$0x1]
    %645 = vst [vmem:[#allocation13] sm:$0x1] %v644
    %s646 = sadd.s32 %s641, 1
    %s647 = sld [smem:[#allocation2 + %s646]]
    %s648 = scalar_lea.vmem [#allocation6], %s647
    %v649 = vld [vmem:[%s648] sm:$0x1]
    %650 = vst [vmem:[#allocation13 + $0x1] sm:$0x1] %v649
    %s651 = sadd.s32 %s641, 2
    %s652 = sld [smem:[#allocation2 + %s651]]
    %s653 = scalar_lea.vmem [#allocation6], %s652
    %v654 = vld [vmem:[%s653] sm:$0x1]
    %655 = vst [vmem:[#allocation13 + $0x2] sm:$0x1] %v654
    %s656 = sadd.s32 %s641, 3
    %s657 = sld [smem:[#allocation2 + %s656]]
    %s658 = scalar_lea.vmem [#allocation6], %s657
    %v659 = vld [vmem:[%s658] sm:$0x1]
    %660 = vst [vmem:[#allocation13 + $0x3] sm:$0x1] %v659
    %s661 = sadd.s32 %s641, 4
    %s662 = sld [smem:[#allocation2 + %s661]]
    %s663 = scalar_lea.vmem [#allocation6], %s662
    %v664 = vld [vmem:[%s663] sm:$0x1]
    %665 = vst [vmem:[#allocation13 + $0x4] sm:$0x1] %v664
    %s666 = sadd.s32 %s641, 5
    %s667 = sld [smem:[#allocation2 + %s666]]
    %s668 = scalar_lea.vmem [#allocation6], %s667
    %v669 = vld [vmem:[%s668] sm:$0x1]
    %670 = vst [vmem:[#allocation13 + $0x5] sm:$0x1] %v669
    %s671 = sadd.s32 %s641, 6
    %s672 = sld [smem:[#allocation2 + %s671]]
    %s673 = scalar_lea.vmem [#allocation6], %s672
    %v674 = vld [vmem:[%s673] sm:$0x1]
    %675 = vst [vmem:[#allocation13 + $0x6] sm:$0x1] %v674
    %s676 = sadd.s32 %s641, 7
    %s677 = sld [smem:[#allocation2 + %s676]]
    %s678 = scalar_lea.vmem [#allocation6], %s677
    %v679 = vld [vmem:[%s678] sm:$0x1]
    %680 = vst [vmem:[#allocation13 + $0x7] sm:$0x1] %v679
    // Predicated region
    $region62: #{tpu_custom_call.1} parent=1 // pred_check
      _
    $region63: #{tpu_custom_call.1} parent=1 // pred_check_branch
      %682 = sbr.rel (0) target = $region65
    $region64: #{tpu_custom_call.1} parent=1 // pred_region
      %s684 = ssub.s32 128, 128
      %685 = vsyncadd [#allocation4], %s684
      %s687 = sshll.u32 [#allocation12], 4
      %s688 = int_to_ptr.vmem [resolvable:$true] %s687
      %690 = dma.vmem_to_hbm [thread:$0]  %s688, 128, %s10, [#allocation4]
    $region65: #{tpu_custom_call.1} parent=1 // pred_fallthru
      _
    // Predicated region
    $region66: #{tpu_custom_call.1} parent=1 // pred_check
      _
    $region67: #{tpu_custom_call.1} parent=1 // pred_check_branch
      %692 = sbr.rel (0) target = $region69
    $region68: #{tpu_custom_call.1} parent=1 // pred_region
      %s694 = ssub.s32 128, 128
      %695 = vsyncadd [#allocation14], %s694
      %s697 = sshll.u32 [#allocation13], 4
      %s698 = int_to_ptr.vmem [resolvable:$true] %s697
      %700 = dma.vmem_to_hbm [thread:$0]  %s698, 128, %s11, [#allocation14]
    $region69: #{tpu_custom_call.1} parent=1 // pred_fallthru
      _
    // Predicated region
    $region70: #{tpu_custom_call.1} parent=1 // pred_check
      _
    $region71: #{tpu_custom_call.1} parent=1 // pred_check_branch
      %702 = sbr.rel (0) target = $region73
    $region72: #{tpu_custom_call.1} parent=1 // pred_region
      %703 = dma.done [#allocation4], 128
    $region73: #{tpu_custom_call.1} parent=1 // pred_fallthru
      _
    // Predicated region
    $region74: #{tpu_custom_call.1} parent=1 // pred_check
      _
    $region75: #{tpu_custom_call.1} parent=1 // pred_check_branch
      %705 = sbr.rel (0) target = $region77
    $region76: #{tpu_custom_call.1} parent=1 // pred_region
      %706 = dma.done [#allocation14], 128
    $region77: #{tpu_custom_call.1} parent=1 // pred_fallthru
      _
    %707 = vsyncpa [#allocation3], 1
    %708 = vsyncpa [#allocation8], 1
    %709 = vsyncpa [#allocation11], 1
    %710 = vsyncpa [#allocation4], 1
    %711 = vsyncpa [#allocation14], 1
    %712 = vsyncpa [#allocation5], 1

</llo_original>
